<compile_context>
chip_gen: v5e
topology: v5e:2x2
jax: 0.10.0
libtpu: 0.0.40
codegen_flags: <defaults>
</compile_context>

<pallas_src>
import jax
import jax.numpy as jnp
import numpy as np
from jax.experimental import pallas as pl
from jax.experimental.pallas import tpu as pltpu


def _round_up(x, m):
    return ((x + m - 1) // m) * m


# -----------------------------------------------------------------------------
# Pallas kernel: one (i, k) grid step of out[i] += adjT[i, k] @ feat[k],
# finalized with the static degree normalization + ReLU on the last k step.
# -----------------------------------------------------------------------------
def _sep_kernel(adj_ref, feat_ref, norm_ref, out_ref):
    k = pl.program_id(1)

    @pl.when(k == 0)
    def _():
        out_ref[...] = jnp.zeros_like(out_ref)

    # adjT is stored compressed (bf16 when counts are exactly representable);
    # cheap VPU upcast, MXU contraction kept in f32 for parity with the f32
    # reference module.
    a = adj_ref[...].astype(jnp.float32)
    out_ref[...] += jnp.dot(a, feat_ref[...], preferred_element_type=jnp.float32)

    @pl.when(k == pl.num_programs(1) - 1)
    def _():
        # rst * deg**norm_2  (norm precomputed per call, (tm,1) lane-broadcast)
        # followed by ReLU (self.nn).
        out_ref[...] = jnp.maximum(out_ref[...] * norm_ref[...], 0.0)


# -----------------------------------------------------------------------------
# Wrapper: pad/compress the static graph once, return a jitted per-feature fwd
# -----------------------------------------------------------------------------
def make_sep(adjT, dim):
    """Build the fused SEP forward for a fixed graph.

    adjT : (N_dst, N_src) dense transposed adjacency, adjT[d, s] = #edges s->d.
    Returns forward(feat, norm_2=-1.0) -> (N_dst, dim) float32.
    """
    M, K = adjT.shape

    # Tile sizes (sublane granularity 16 so bf16 adjT tiles stay aligned) and
    # padded extents.  Feat lane axis padded to a multiple of 128 only (the
    # degree lane is gone, so dim=128k pays no extra column).
    tm = 256 if M > 256 else _round_up(max(M, 16), 16)
    Mp = _round_up(max(M, 16), tm)
    tk = 512 if K > 512 else _round_up(max(K, 128), 128)
    Kp = _round_up(max(K, 128), tk)
    Dp = _round_up(max(dim, 128), 128)

    adj_f32 = jnp.asarray(adjT, jnp.float32)

    # Graph-static in-degree (edge multiplicity summed), clamped to >= 1.
    # Padded rows get deg = 1 (their adjT rows are zero -> output rows are 0).
    deg = jnp.maximum(adj_f32.sum(axis=1), 1.0)                      # (M,)
    deg_p = jnp.ones((Mp, 1), jnp.float32).at[:M, 0].set(deg)

    # Compress the dominant HBM operand: edge counts <= 256 are exact in bf16.
    use_bf16 = bool(adj_f32.size == 0 or float(jnp.max(adj_f32)) <= 256.0)
    adj_dtype = jnp.bfloat16 if use_bf16 else jnp.float32
    adj_bytes = 2 if use_bf16 else 4
    adj_p = jnp.zeros((Mp, Kp), adj_dtype).at[:M, :K].set(adj_f32.astype(adj_dtype))

    grid = (Mp // tm, Kp // tk)

    # Double-buffered residency (+ headroom) for the scoped-VMEM limit.
    resident = (2 * (tm * tk * adj_bytes + tk * Dp * 4 + tm * 1 * 4)
                + 2 * (tm * Dp * 4))
    vmem_limit = int(1.5 * resident) + (4 << 20)

    cost = pl.CostEstimate(
        flops=2 * Mp * Kp * Dp,
        transcendentals=0,
        bytes_accessed=(Mp * Kp * adj_bytes          # adjT streamed once
                        + grid[0] * Kp * Dp * 4      # feat re-read per M tile
                        + Mp * Dp * 4                # output writeback
                        + grid[1] * Mp * 1 * 4),     # norm re-read per K tile
    )

    grid_spec = pltpu.PrefetchScalarGridSpec(
        num_scalar_prefetch=0,
        grid=grid,
        in_specs=[
            pl.BlockSpec((tm, tk), lambda i, k: (i, k)),   # adjT tile (bf16/f32)
            pl.BlockSpec((tk, Dp), lambda i, k: (k, 0)),   # feat tile (f32)
            pl.BlockSpec((tm, 1), lambda i, k: (i, 0)),    # per-row norm (f32)
        ],
        out_specs=pl.BlockSpec((tm, Dp), lambda i, k: (i, 0)),
    )

    call = pl.pallas_call(
        _sep_kernel,
        out_shape=jax.ShapeDtypeStruct((Mp, Dp), jnp.float32),
        grid_spec=grid_spec,
        compiler_params=pltpu.CompilerParams(
            dimension_semantics=("parallel", "arbitrary"),  # M sharded on v7x's 2 TCs
            vmem_limit_bytes=vmem_limit,
        ),
        cost_estimate=cost,
    )

    def _forward(feat, norm_2):
        # Zero-pad features; under jit this fuses with the pallas_call dispatch.
        feat_p = jnp.zeros((Kp, Dp), jnp.float32).at[:K, :dim].set(
            feat.astype(jnp.float32))
        norm = jnp.power(deg_p, norm_2)                 # (Mp, 1) tiny elementwise
        out = call(adj_p, feat_p, norm)
        # TODO(synk): downstream layers could consume the lane-padded (Mp, Dp)
        #   layout directly and slice only at the model boundary.
        return out[:M, :dim]

    _forward_jit = jax.jit(_forward)

    def forward(feat, norm_2=-1.0):
        # Pass the power as a traced f32 scalar: no recompiles across powers.
        return _forward_jit(feat, jnp.float32(norm_2))

    return forward


# -----------------------------------------------------------------------------
# Pure-JAX reference (mirrors the PyTorch SEP.forward exactly)
# -----------------------------------------------------------------------------
def sep_ref(adjT, feat, norm_2=-1.0):
    adjT = adjT.astype(jnp.float32)
    rst = adjT @ feat.astype(jnp.float32)
    deg = jnp.maximum(adjT.sum(axis=1, keepdims=True), 1.0)
    return jnp.maximum(rst * (deg ** norm_2), 0.0)


def dense_adjT(src_idx, dst_idx, n_src, n_dst):
    # adjT[d, s] = number of edges s -> d (multigraph multiplicity summed,
    # matching DGL fn.copy_u + fn.sum and graph.in_degrees()).
    return jnp.zeros((n_dst, n_src), jnp.float32).at[dst_idx, src_idx].add(1.0)


if __name__ == "__main__":
    key = jax.random.PRNGKey(0)
    k_src, k_dst, k_h = jax.random.split(key, 3)

    D = 32                              # SEP(dim)
    N_src, N_dst, E = 24, 16, 60        # small bipartite graph (etype_forward)
    e_src = jax.random.randint(k_src, (E,), 0, N_src)
    e_dst = jax.random.randint(k_dst, (E,), 0, N_dst)
    adjT = dense_adjT(e_src, e_dst, N_src, N_dst)

    h = jax.random.normal(k_h, (N_src, D), jnp.float32)

    sep = make_sep(adjT, D)

    # Exercise the default (-1), the rsqrt-like (-0.5) and a generic power —
    # all reuse one compiled kernel (power is a traced scalar).
    for p in (-1.0, -0.5, -2.0):
        out = jax.block_until_ready(sep(h, p))
        assert out.shape == (N_dst, D)
        ref = sep_ref(adjT, h, p)
        np.testing.assert_allclose(np.asarray(out), np.asarray(ref),
                                   rtol=1e-4, atol=1e-4)

    print("KERNEL_OK")
</pallas_src>

<mosaic_0001>
module attributes {stable_mosaic.version = 11 : i64} {
  func.func @_sep_kernel(%arg0: i32, %arg1: i32, %arg2: memref<16x128xbf16, #tpu.memory_space<vmem>>, %arg3: memref<128x128xf32, #tpu.memory_space<vmem>>, %arg4: memref<16x1xf32, #tpu.memory_space<vmem>>, %arg5: memref<16x128xf32, #tpu.memory_space<vmem>>) attributes {dimension_semantics = [#tpu.dimension_semantics<parallel>, #tpu.dimension_semantics<arbitrary>], iteration_bounds = array<i64: 1, 1>, scalar_prefetch = 0 : i64, scratch_operands = 0 : i64, tpu.core_type = #tpu.core_type<tc>, window_params = [{transform_indices = @transform_0, window_bounds = array<i64: 16, 128>}, {transform_indices = @transform_1, window_bounds = array<i64: 128, 128>}, {transform_indices = @transform_2, window_bounds = array<i64: 16, 1>}, {transform_indices = @transform_3, window_bounds = array<i64: 16, 128>}]} {
    %c0_i32 = arith.constant 0 : i32
    %0 = arith.cmpi eq, %arg1, %c0_i32 : i32
    %1 = arith.extui %0 : i1 to i32
    %c0_i32_0 = arith.constant 0 : i32
    %2 = arith.cmpi ne, %1, %c0_i32_0 : i32
    scf.if %2 {
      %cst_10 = arith.constant 0.000000e+00 : f32
      %13 = vector.broadcast %cst_10 : f32 to vector<16x128xf32>
      %c0_11 = arith.constant 0 : index
      %c0_12 = arith.constant 0 : index
      %14 = vector.load %arg5[%c0_11, %c0_12] : memref<16x128xf32, #tpu.memory_space<vmem>>, vector<16x128xf32>
      tpu.vector_store %arg5[%c0_11, %c0_12], %13 {strides = array<i32>} : memref<16x128xf32, #tpu.memory_space<vmem>>, vector<16x128xf32>,
    } else {
    }
    %c0 = arith.constant 0 : index
    %c0_1 = arith.constant 0 : index
    %3 = vector.load %arg2[%c0, %c0_1] : memref<16x128xbf16, #tpu.memory_space<vmem>>, vector<16x128xbf16>
    %4 = arith.extf %3 : vector<16x128xbf16> to vector<16x128xf32>
    %c0_2 = arith.constant 0 : index
    %c0_3 = arith.constant 0 : index
    %5 = vector.load %arg5[%c0_2, %c0_3] : memref<16x128xf32, #tpu.memory_space<vmem>>, vector<16x128xf32>
    %c0_4 = arith.constant 0 : index
    %c0_5 = arith.constant 0 : index
    %6 = vector.load %arg3[%c0_4, %c0_5] : memref<128x128xf32, #tpu.memory_space<vmem>>, vector<128x128xf32>
    %cst = arith.constant dense<0.000000e+00> : vector<16x128xf32>
    %7 = tpu.matmul %4, %6, %cst {dimension_numbers = #tpu.dot_dimension_numbers<[1], [0], [0], [1], [0, 0, 1, 1], [], []>} : vector<16x128xf32>, vector<128x128xf32>, vector<16x128xf32> -> vector<16x128xf32>
    %8 = arith.addf %5, %7 : vector<16x128xf32>
    %c0_6 = arith.constant 0 : index
    %c0_7 = arith.constant 0 : index
    %9 = vector.load %arg5[%c0_6, %c0_7] : memref<16x128xf32, #tpu.memory_space<vmem>>, vector<16x128xf32>
    tpu.vector_store %arg5[%c0_6, %c0_7], %8 {strides = array<i32>} : memref<16x128xf32, #tpu.memory_space<vmem>>, vector<16x128xf32>,
    %c0_i32_8 = arith.constant 0 : i32
    %10 = arith.cmpi eq, %arg1, %c0_i32_8 : i32
    %11 = arith.extui %10 : i1 to i32
    %c0_i32_9 = arith.constant 0 : i32
    %12 = arith.cmpi ne, %11, %c0_i32_9 : i32
    scf.if %12 {
      %c0_10 = arith.constant 0 : index
      %c0_11 = arith.constant 0 : index
      %13 = vector.load %arg5[%c0_10, %c0_11] : memref<16x128xf32, #tpu.memory_space<vmem>>, vector<16x128xf32>
      %c0_12 = arith.constant 0 : index
      %c0_13 = arith.constant 0 : index
      %14 = vector.load %arg4[%c0_12, %c0_13] : memref<16x1xf32, #tpu.memory_space<vmem>>, vector<16x1xf32>
      %15 = vector.broadcast %14 : vector<16x1xf32> to vector<16x128xf32>
      %16 = arith.mulf %13, %15 : vector<16x128xf32>
      %cst_14 = arith.constant 0.000000e+00 : f32
      %17 = vector.broadcast %cst_14 : f32 to vector<16x128xf32>
      %18 = arith.maximumf %16, %17 : vector<16x128xf32>
      %c0_15 = arith.constant 0 : index
      %c0_16 = arith.constant 0 : index
      %19 = vector.load %arg5[%c0_15, %c0_16] : memref<16x128xf32, #tpu.memory_space<vmem>>, vector<16x128xf32>
      tpu.vector_store %arg5[%c0_15, %c0_16], %18 {strides = array<i32>} : memref<16x128xf32, #tpu.memory_space<vmem>>, vector<16x128xf32>,
    } else {
    }
    return
  }
  func.func @transform_0(%arg0: i32, %arg1: i32) -> (i32, i32) {
    %c0_i32 = arith.constant 0 : i32
    return %arg0, %arg1 : i32, i32
  }
  func.func @transform_1(%arg0: i32, %arg1: i32) -> (i32, i32) {
    %c0_i32 = arith.constant 0 : i32
    %c0_i32_0 = arith.constant 0 : i32
    return %arg1, %c0_i32 : i32, i32
  }
  func.func @transform_2(%arg0: i32, %arg1: i32) -> (i32, i32) {
    %c0_i32 = arith.constant 0 : i32
    %c0_i32_0 = arith.constant 0 : i32
    return %arg0, %c0_i32 : i32, i32
  }
  func.func @transform_3(%arg0: i32, %arg1: i32) -> (i32, i32) {
    %c0_i32 = arith.constant 0 : i32
    %c0_i32_0 = arith.constant 0 : i32
    return %arg0, %c0_i32 : i32, i32
  }
}

</mosaic_0001>

<llo_original>
// kernel: _forward.1
$region0: #{_forward.1}
  #allocation0 [shape = 'u32[]', space=smem, size = 0x4, offset = 0x4, fixed_abs, tag = 'smem constant byte address 0x4 - core index']
  #allocation1 [shape = 'u32[72,128]{1,0:T(1,128)}', space=vmem, size = 0x9000, scoped, tag = 'internal scratch']
  %s0 = inlined_call_operand.vmem [shape: bf16[16,128], index: 0, kind: input, shape index: {}]
  %s1 = inlined_call_operand.vmem [shape: f32[128,128], index: 1, kind: input, shape index: {}]
  %s2 = inlined_call_operand.vmem [shape: f32[16,1], index: 2, kind: input, shape index: {}]
  %s3 = inlined_call_operand.hbm [shape: f32[16,128], index: 3, kind: output, shape index: {}]
  %s4 = sld [smem:[#allocation0]]
  $region30: #{_forward.1} parent=0
    _
  %s6 = ssub.s32 1, %s4
  %s7 = scalar_select 0, %s6, %s4
  $region1: #{_forward.1} parent=0
    #allocation2 [shape = 'u8[8192]{0}', space=vmem, size = 0x2000, scoped, tag = 'output window, operand 0, single buffered']
    #allocation3 [shape = 's32[1]{0}', space=sflag, size = 0x4, scoped, tag = 'scoped memory for _forward.1']
    %8 = vsyncpa [#allocation3], 0
    // Predicated region
    $region2: #{_forward.1} parent=1 // pred_check
      _
    $region3: #{_forward.1} parent=1 // pred_check_branch
      %10 = sbr.rel (0) target = $region5
    $region4: #{_forward.1} parent=1 // pred_region
      _
    $region5: #{_forward.1} parent=1 // pred_fallthru
      _
    // Predicated region
    $region6: #{_forward.1} parent=1 // pred_check
      _
    $region7: #{_forward.1} parent=1 // pred_check_branch
      %12 = sbr.rel (0) target = $region9
    $region8: #{_forward.1} parent=1 // pred_region
      _
    $region9: #{_forward.1} parent=1 // pred_fallthru
      _
    // Predicated region
    $region10: #{_forward.1} parent=1 // pred_check
      _
    $region11: #{_forward.1} parent=1 // pred_check_branch
      %14 = sbr.rel (0) target = $region13
    $region12: #{_forward.1} parent=1 // pred_region
      _
    $region13: #{_forward.1} parent=1 // pred_fallthru
      _
    %p15 = scmp.eq.s32.totalorder 0, 0
    // Predicated region
    $region14: #{_forward.1} parent=1 // pred_check
      %p16 = pneg %p15
    $region15: #{_forward.1} parent=1 // pred_check_branch
      %18 = sbr.rel (%p16) target = $region17
    $region16: #{_forward.1} parent=1 // pred_region
      %19 = vst [vmem:[#allocation2] sm:$0xff] 0.0
      %20 = vst [vmem:[#allocation2 + $0x8] sm:$0xff] 0.0
    $region17: #{_forward.1} parent=1 // pred_fallthru
      _
    %v21 = vld [vmem:[%s0] sm:$0xf]
    %v22 = vld [vmem:[%s0 + $0x4] sm:$0xf]
    %v23 = vunpack.c.l.bf16 %v21
    %v24 = vunpack.c.l.bf16 %v22
    %v25 = vld [vmem:[#allocation2] sm:$0xff]
    %v26 = vld [vmem:[#allocation2 + $0x8] sm:$0xff]
    %v27 = vld [vmem:[%s1] sm:$0xff]
    %v28 = vld [vmem:[%s1 + $0x8] sm:$0xff]
    %v29 = vld [vmem:[%s1 + $0x10] sm:$0xff]
    %v30 = vld [vmem:[%s1 + $0x18] sm:$0xff]
    %v31 = vld [vmem:[%s1 + $0x20] sm:$0xff]
    %v32 = vld [vmem:[%s1 + $0x28] sm:$0xff]
    %v33 = vld [vmem:[%s1 + $0x30] sm:$0xff]
    %v34 = vld [vmem:[%s1 + $0x38] sm:$0xff]
    %v35 = vld [vmem:[%s1 + $0x40] sm:$0xff]
    %v36 = vld [vmem:[%s1 + $0x48] sm:$0xff]
    %v37 = vld [vmem:[%s1 + $0x50] sm:$0xff]
    %v38 = vld [vmem:[%s1 + $0x58] sm:$0xff]
    %v39 = vld [vmem:[%s1 + $0x60] sm:$0xff]
    %v40 = vld [vmem:[%s1 + $0x68] sm:$0xff]
    %v41 = vld [vmem:[%s1 + $0x70] sm:$0xff]
    %v42 = vld [vmem:[%s1 + $0x78] sm:$0xff]
    %43 = vmatpush.msra.mxu0 %v42
    %44 = vmatpush.msra.mxu0 %v41
    %45 = vmatpush.msra.mxu0 %v40
    %46 = vmatpush.msra.mxu0 %v39
    %47 = vmatpush.msra.mxu0 %v38
    %48 = vmatpush.msra.mxu0 %v37
    %49 = vmatpush.msra.mxu0 %v36
    %50 = vmatpush.msra.mxu0 %v35
    %51 = vmatpush.msra.mxu0 %v34
    %52 = vmatpush.msra.mxu0 %v33
    %53 = vmatpush.msra.mxu0 %v32
    %54 = vmatpush.msra.mxu0 %v31
    %55 = vmatpush.msra.mxu0 %v30
    %56 = vmatpush.msra.mxu0 %v29
    %57 = vmatpush.msra.mxu0 %v28
    %58 = vmatpush.msra.mxu0 %v27
    %59 = vmatmul.f32.gmra.mxu0 %v23
    %v60 = vpop.f32.mrf.mxu0
    %v61 = vadd.f32 0.0, %v60
    %62 = vmatmul.f32.gmra.mxu0 %v24
    %v63 = vpop.f32.mrf.mxu0
    %v64 = vadd.f32 0.0, %v63
    %65 = vdwg.mxu0
    %v66 = vadd.f32 %v25, %v61
    %v67 = vadd.f32 %v26, %v64
    %68 = vst [vmem:[#allocation2] sm:$0xff] %v66
    %69 = vst [vmem:[#allocation2 + $0x8] sm:$0xff] %v67
    // Predicated region
    $region18: #{_forward.1} parent=1 // pred_check
      %p70 = pneg %p15
    $region19: #{_forward.1} parent=1 // pred_check_branch
      %72 = sbr.rel (%p70) target = $region21
    $region20: #{_forward.1} parent=1 // pred_region
      %v73 = vld [vmem:[#allocation2] sm:$0xff]
      %v74 = vld [vmem:[#allocation2 + $0x8] sm:$0xff]
      %v75 = vld [vmem:[%s2] sm:$0xff]
      %v76 = vld [vmem:[%s2 + $0x8] sm:$0xff]
      %78 = vset.pattern.permute.xlu0 0
      %79 = vperm.xlu0 %78, %v75
      %v80 = vpop.permute.xlu0 %79
      %83 = vset.pattern.permute.xlu0 0
      %84 = vperm.xlu0 %83, %v76
      %v85 = vpop.permute.xlu0 %84
      %v87 = vmul.f32 %v73, %v80
      %v88 = vmul.f32 %v74, %v85
      %v89 = vmax.f32 %v87, 0.0
      %v90 = vmax.f32 %v88, 0.0
      %91 = vst [vmem:[#allocation2] sm:$0xff] %v89
      %92 = vst [vmem:[#allocation2 + $0x8] sm:$0xff] %v90
    $region21: #{_forward.1} parent=1 // pred_fallthru
      _
    // Predicated region
    $region22: #{_forward.1} parent=1 // pred_check
      _
    $region23: #{_forward.1} parent=1 // pred_check_branch
      %94 = sbr.rel (0) target = $region25
    $region24: #{_forward.1} parent=1 // pred_region
      %96 = vsyncadd [#allocation3], 0
      %s97 = sshll.u32 [#allocation2], 4
      %s98 = int_to_ptr.vmem [resolvable:$true] %s97
      %s99 = sshll.u32 %s3, 4
      %s100 = int_to_ptr.hbm [resolvable:$true] %s99
      %105 = dma.vmem_to_hbm [thread:$0]  %s98, 256, %s100, [#allocation3], 128, 128, 8
    $region25: #{_forward.1} parent=1 // pred_fallthru
      _
    // Predicated region
    $region26: #{_forward.1} parent=1 // pred_check
      _
    $region27: #{_forward.1} parent=1 // pred_check_branch
      %107 = sbr.rel (0) target = $region29
    $region28: #{_forward.1} parent=1 // pred_region
      %109 = dma.done [#allocation3], 256
    $region29: #{_forward.1} parent=1 // pred_fallthru
      _
    %110 = vsyncpa [#allocation3], 1

</llo_original>
